<compile_context>
chip_gen: v7x
topology: tpu7x:2x2x1
jax: 0.10.0
libtpu: 0.0.40
codegen_flags: <defaults>
</compile_context>

<pallas_src>
import jax
import jax.numpy as jnp
from jax.experimental import pallas as pl
from jax.experimental.pallas import tpu as pltpu


# ---------------------------------------------------------------------------
# In-kernel helper: transposed item MLP.
#   h_con^T = W_out^T @ relu(W_h1^T @ relu(W_in^T @ x^T + b_in) + b_h1) + b_out
# All intermediates are lane-dense along the item-tile axis (last dim = TI).
# bf16 MXU operands, f32 accumulation; bias-add / ReLU stay f32 (v5e VPU-safe).
# ---------------------------------------------------------------------------
def _mlp_transposed(x_ref, wi_ref, bi_ref, wh_ref, bh_ref, wo_ref, bo_ref):
    f32, bf16 = jnp.float32, jnp.bfloat16
    z = jnp.dot(wi_ref[...], x_ref[...], preferred_element_type=f32)
    z = jnp.maximum(z + bi_ref[...], 0.0)
    z = jnp.dot(wh_ref[...], z.astype(bf16), preferred_element_type=f32)
    z = jnp.maximum(z + bh_ref[...], 0.0)
    z = jnp.dot(wo_ref[...], z.astype(bf16), preferred_element_type=f32)
    return z + bo_ref[...]                                   # (E, TI) f32


# Fused kernel, h == h_con path (strict variant, or all(i == -1)).
def fused_con_kernel(x_ref, wi_ref, bi_ref, wh_ref, bh_ref, wo_ref, bo_ref,
                     w_ref, pred_ref, hcon_t_ref, h_scr):
    # First user tile of this item tile: build h_con once, keep it resident in
    # VMEM scratch for the whole inner user sweep, write it to HBM once.
    @pl.when(pl.program_id(1) == 0)
    def _():
        hc = _mlp_transposed(x_ref, wi_ref, bi_ref, wh_ref, bh_ref,
                             wo_ref, bo_ref)
        hcon_t_ref[...] = hc                                 # lane-dense (E, TI)
        h_scr[...] = hc.astype(jnp.bfloat16)

    # pred tile (TU, TI): h already (E, TI) -> plain matmul, no transpose.
    pred_ref[...] = jnp.dot(w_ref[...], h_scr[...],
                            preferred_element_type=jnp.float32)


# Fused kernel, h == item_emb(i) path (relaxed variant).
def fused_emb_kernel(x_ref, wi_ref, bi_ref, wh_ref, bh_ref, wo_ref, bo_ref,
                     w_ref, h_t_ref, pred_ref, hcon_t_ref):
    @pl.when(pl.program_id(1) == 0)
    def _():
        hcon_t_ref[...] = _mlp_transposed(x_ref, wi_ref, bi_ref, wh_ref,
                                          bh_ref, wo_ref, bo_ref)

    pred_ref[...] = jnp.dot(w_ref[...], h_t_ref[...],
                            preferred_element_type=jnp.float32)


def _round_up(n, m):
    return ((n + m - 1) // m) * m


def fused_forward(x, W_in, b_in, W_h1, b_h1, W_out, b_out, w, h_emb=None,
                  *, tile_items=512, tile_users=256):
    """Fused item-MLP + score kernel. Returns (pred (U,I) f32, h_con^T (E,I) f32)."""
    I, F_in = x.shape
    F_hid = W_in.shape[1]
    E = W_out.shape[1]
    U = w.shape[0]

    # Item tile: lane axis, multiple of 128 (pad the item dim up to the tile).
    TI = min(tile_items, _round_up(I, 128))
    I_pad = _round_up(I, TI)
    # User tile: sublane axis, multiple of 8 (ideally 256 to fill the MXU M dim).
    TU = min(tile_users, _round_up(U, 8))
    U_pad = _round_up(U, TU)

    bf16, f32 = jnp.bfloat16, jnp.float32

    # Transposed, item-lane-dense layouts; bf16 for every streamed MXU operand.
    x_t = jnp.pad(x, ((0, I_pad - I), (0, 0))).T.astype(bf16)       # (F_in, I_pad)
    w_p = jnp.pad(w, ((0, U_pad - U), (0, 0))).astype(bf16)         # (U_pad, E)
    Wi = W_in.T.astype(bf16)                                        # (F_hid, F_in)
    Wh = W_h1.T.astype(bf16)                                        # (F_hid, F_hid)
    Wo = W_out.T.astype(bf16)                                       # (E, F_hid)
    bi = b_in.reshape(F_hid, 1).astype(f32)
    bh = b_h1.reshape(F_hid, 1).astype(f32)
    bo = b_out.reshape(E, 1).astype(f32)

    n_it, n_ut = I_pad // TI, U_pad // TU
    const = lambda it, ut: (0, 0)

    in_specs = [
        pl.BlockSpec((F_in, TI), lambda it, ut: (0, it)),   # x tile: changes per item tile
        pl.BlockSpec((F_hid, F_in), const),                 # resident MLP weights/biases
        pl.BlockSpec((F_hid, 1), const),
        pl.BlockSpec((F_hid, F_hid), const),
        pl.BlockSpec((F_hid, 1), const),
        pl.BlockSpec((E, F_hid), const),
        pl.BlockSpec((E, 1), const),
        pl.BlockSpec((TU, E), lambda it, ut: (ut, 0)),      # w tile streams on inner axis
    ]
    args = [x_t, Wi, bi, Wh, bh, Wo, bo, w_p]

    if h_emb is not None:
        h_t = jnp.pad(h_emb, ((0, I_pad - I), (0, 0))).T.astype(bf16)   # (E, I_pad)
        in_specs.append(pl.BlockSpec((E, TI), lambda it, ut: (0, it)))
        args.append(h_t)
        kernel = fused_emb_kernel
        scratch = []
    else:
        kernel = fused_con_kernel
        scratch = [pltpu.VMEM((E, TI), bf16)]               # resident h_con tile

    mlp_flops = 2 * I_pad * (F_in * F_hid + F_hid * F_hid + F_hid * E)
    score_flops = 2 * U_pad * I_pad * E
    in_bytes = 2 * (x_t.size + Wi.size + Wh.size + Wo.size + w_p.size
                    + (I_pad * E if h_emb is not None else 0)) \
               + 4 * (bi.size + bh.size + bo.size)
    out_bytes = 4 * (U_pad * I_pad + E * I_pad)

    pred_pad, hcon_t_pad = pl.pallas_call(
        kernel,
        out_shape=(jax.ShapeDtypeStruct((U_pad, I_pad), f32),
                   jax.ShapeDtypeStruct((E, I_pad), f32)),
        grid=(n_it, n_ut),
        in_specs=in_specs,
        out_specs=(pl.BlockSpec((TU, TI), lambda it, ut: (ut, it)),
                   pl.BlockSpec((E, TI), lambda it, ut: (0, it))),
        scratch_shapes=scratch,
        compiler_params=pltpu.CompilerParams(
            dimension_semantics=("parallel", "arbitrary"),
            vmem_limit_bytes=32 * 1024 * 1024),
        cost_estimate=pl.CostEstimate(flops=mlp_flops + score_flops,
                                      transcendentals=0,
                                      bytes_accessed=in_bytes + out_bytes),
    )(*args)

    return pred_pad[:U, :I], hcon_t_pad[:, :I]


def mfuni_forward(u, x, i, params, variant):
    """Mirrors ModelMFuni.forward(u, x, i) -> (pred_rat, w, h, h_con)."""
    user_emb, item_emb, W_in, b_in, W_h1, b_h1, W_out, b_out = params

    w = user_emb[u]                                          # (U, E) gather, plain JAX

    # torch does a host-level `all(i == -1)` check; mirrored here. This syncs to
    # host and is not jittable by design (matches the reference module).
    use_item_emb = (variant == 'relaxed') and (not bool(jnp.all(i == -1)))

    if use_item_emb:
        # Note: JAX gathers clamp out-of-range indices instead of erroring as
        # torch.nn.Embedding would for stray -1 entries.
        h = item_emb[i]                                      # (I, E)
        pred_rat, hcon_t = fused_forward(x, W_in, b_in, W_h1, b_h1,
                                         W_out, b_out, w, h_emb=h)
        h_con = hcon_t.T                                     # (I, E)
    else:
        pred_rat, hcon_t = fused_forward(x, W_in, b_in, W_h1, b_h1,
                                         W_out, b_out, w)
        h_con = hcon_t.T
        h = h_con
    return pred_rat, w, h, h_con


def init_params(key, n_users, n_songs, n_embeddings, n_features_in,
                n_features_hidden):
    """Synthetic parameters matching ModelMFuni.__init__ shapes.
    Linear weights stored (in, out), i.e. transposed vs torch.nn.Linear."""
    keys = jax.random.split(key, 8)
    E = n_embeddings

    user_emb = 0.01 * jax.random.normal(keys[0], (n_users, E), jnp.float32)
    item_emb = 0.01 * jax.random.normal(keys[1], (n_songs, E), jnp.float32)

    def linear(kw, kb, fan_in, fan_out):
        lim = float(fan_in) ** -0.5
        W = jax.random.uniform(kw, (fan_in, fan_out), jnp.float32, -lim, lim)
        b = jax.random.uniform(kb, (fan_out,), jnp.float32, -lim, lim)
        return W, b

    W_in, b_in = linear(keys[2], keys[3], n_features_in, n_features_hidden)
    W_h1, b_h1 = linear(keys[4], keys[5], n_features_hidden, n_features_hidden)
    W_out, b_out = linear(keys[6], keys[7], n_features_hidden, E)
    return (user_emb, item_emb, W_in, b_in, W_h1, b_h1, W_out, b_out)


if __name__ == "__main__":
    # 640 songs -> two 512-wide item tiles (padded to 1024), exercising padding,
    # the multi-item-tile sweep and lane-dense (E, TI) stores.
    n_users, n_songs = 16, 640
    n_features_in, n_features_hidden, n_embeddings = 16, 32, 32
    variant = 'relaxed'

    key = jax.random.PRNGKey(0)
    kp, kx = jax.random.split(key)
    params = init_params(kp, n_users, n_songs, n_embeddings,
                         n_features_in, n_features_hidden)

    u = jnp.arange(n_users, dtype=jnp.int32)
    i = jnp.arange(n_songs, dtype=jnp.int32)                 # relaxed: item embeddings
    x = jax.random.normal(kx, (n_songs, n_features_in), jnp.float32)

    pred_rat, w, h, h_con = mfuni_forward(u, x, i, params, variant)
    jax.block_until_ready((pred_rat, w, h, h_con))

    assert pred_rat.shape == (n_users, n_songs)
    assert w.shape == (n_users, n_embeddings)
    assert h.shape == (n_songs, n_embeddings)
    assert h_con.shape == (n_songs, n_embeddings)

    # Plain-JAX reference mirroring the kernel math (bf16 MXU operands, f32 accum).
    user_emb, item_emb, W_in, b_in, W_h1, b_h1, W_out, b_out = params
    bf = lambda a: a.astype(jnp.bfloat16)
    dot = lambda a, b: jnp.dot(bf(a), bf(b), preferred_element_type=jnp.float32)

    z = jnp.maximum(dot(x, W_in) + b_in, 0.0)
    z = jnp.maximum(dot(z, W_h1) + b_h1, 0.0)
    hcon_ref = dot(z, W_out) + b_out
    h_ref = item_emb[i]
    w_ref = user_emb[u]
    pred_ref = jnp.dot(bf(h_ref), bf(w_ref).T, preferred_element_type=jnp.float32).T

    assert jnp.allclose(w, w_ref), "w mismatch"
    assert jnp.allclose(h, h_ref), "h mismatch"
    assert jnp.allclose(h_con, hcon_ref, atol=1e-3, rtol=1e-3), "h_con mismatch"
    assert jnp.allclose(pred_rat, pred_ref, atol=1e-4, rtol=1e-3), "pred_rat mismatch"

    # Also exercise the `all(i == -1)` / h = h_con path (fused_con_kernel).
    i_neg = -jnp.ones((n_songs,), jnp.int32)
    pred2, _, h2, hcon2 = mfuni_forward(u, x, i_neg, params, variant)
    jax.block_until_ready((pred2, h2, hcon2))
    pred2_ref = jnp.dot(bf(hcon_ref), bf(w_ref).T,
                        preferred_element_type=jnp.float32).T
    assert jnp.allclose(h2, hcon2), "h should alias h_con when all(i == -1)"
    assert jnp.allclose(hcon2, hcon_ref, atol=1e-3, rtol=1e-3), "h_con mismatch (con path)"
    assert jnp.allclose(pred2, pred2_ref, atol=1e-3, rtol=1e-3), "pred mismatch (h_con path)"

    print("KERNEL_OK")
</pallas_src>

<mosaic_0001>
module attributes {stable_mosaic.version = 11 : i64} {
  func.func @fused_emb_kernel(%arg0: i32, %arg1: i32, %arg2: memref<16x512xbf16, #tpu.memory_space<vmem>>, %arg3: memref<32x16xbf16, #tpu.memory_space<vmem>>, %arg4: memref<32x1xf32, #tpu.memory_space<vmem>>, %arg5: memref<32x32xbf16, #tpu.memory_space<vmem>>, %arg6: memref<32x1xf32, #tpu.memory_space<vmem>>, %arg7: memref<32x32xbf16, #tpu.memory_space<vmem>>, %arg8: memref<32x1xf32, #tpu.memory_space<vmem>>, %arg9: memref<16x32xbf16, #tpu.memory_space<vmem>>, %arg10: memref<32x512xbf16, #tpu.memory_space<vmem>>, %arg11: memref<16x512xf32, #tpu.memory_space<vmem>>, %arg12: memref<32x512xf32, #tpu.memory_space<vmem>>) attributes {dimension_semantics = [#tpu.dimension_semantics<parallel>, #tpu.dimension_semantics<arbitrary>], iteration_bounds = array<i64: 2, 1>, scalar_prefetch = 0 : i64, scratch_operands = 0 : i64, tpu.core_type = #tpu.core_type<tc>, window_params = [{transform_indices = @transform_0, window_bounds = array<i64: 16, 512>}, {pipeline_mode = #tpu.pipeline_mode<synchronous>, transform_indices = @transform_1, window_bounds = array<i64: 32, 16>}, {pipeline_mode = #tpu.pipeline_mode<synchronous>, transform_indices = @transform_2, window_bounds = array<i64: 32, 1>}, {pipeline_mode = #tpu.pipeline_mode<synchronous>, transform_indices = @transform_3, window_bounds = array<i64: 32, 32>}, {pipeline_mode = #tpu.pipeline_mode<synchronous>, transform_indices = @transform_4, window_bounds = array<i64: 32, 1>}, {pipeline_mode = #tpu.pipeline_mode<synchronous>, transform_indices = @transform_5, window_bounds = array<i64: 32, 32>}, {pipeline_mode = #tpu.pipeline_mode<synchronous>, transform_indices = @transform_6, window_bounds = array<i64: 32, 1>}, {transform_indices = @transform_7, window_bounds = array<i64: 16, 32>}, {transform_indices = @transform_8, window_bounds = array<i64: 32, 512>}, {transform_indices = @transform_9, window_bounds = array<i64: 16, 512>}, {transform_indices = @transform_10, window_bounds = array<i64: 32, 512>}]} {
    %c0_i32 = arith.constant 0 : i32
    %0 = arith.cmpi eq, %arg1, %c0_i32 : i32
    %1 = arith.extui %0 : i1 to i32
    %c0_i32_0 = arith.constant 0 : i32
    %2 = arith.cmpi ne, %1, %c0_i32_0 : i32
    scf.if %2 {
      %c0_6 = arith.constant 0 : index
      %c0_7 = arith.constant 0 : index
      %7 = vector.load %arg3[%c0_6, %c0_7] : memref<32x16xbf16, #tpu.memory_space<vmem>>, vector<32x16xbf16>
      %c0_8 = arith.constant 0 : index
      %c0_9 = arith.constant 0 : index
      %8 = vector.load %arg2[%c0_8, %c0_9] : memref<16x512xbf16, #tpu.memory_space<vmem>>, vector<16x512xbf16>
      %cst_10 = arith.constant dense<0.000000e+00> : vector<32x512xf32>
      %9 = tpu.matmul %7, %8, %cst_10 {dimension_numbers = #tpu.dot_dimension_numbers<[1], [0], [0], [1], [0, 0, 1, 1], [], []>} : vector<32x16xbf16>, vector<16x512xbf16>, vector<32x512xf32> -> vector<32x512xf32>
      %c0_11 = arith.constant 0 : index
      %c0_12 = arith.constant 0 : index
      %10 = vector.load %arg4[%c0_11, %c0_12] : memref<32x1xf32, #tpu.memory_space<vmem>>, vector<32x1xf32>
      %11 = vector.broadcast %10 : vector<32x1xf32> to vector<32x512xf32>
      %12 = arith.addf %9, %11 : vector<32x512xf32>
      %cst_13 = arith.constant 0.000000e+00 : f32
      %13 = vector.broadcast %cst_13 : f32 to vector<32x512xf32>
      %14 = arith.maximumf %12, %13 : vector<32x512xf32>
      %c0_14 = arith.constant 0 : index
      %c0_15 = arith.constant 0 : index
      %15 = vector.load %arg5[%c0_14, %c0_15] : memref<32x32xbf16, #tpu.memory_space<vmem>>, vector<32x32xbf16>
      %16 = arith.truncf %14 : vector<32x512xf32> to vector<32x512xbf16>
      %cst_16 = arith.constant dense<0.000000e+00> : vector<32x512xf32>
      %17 = tpu.matmul %15, %16, %cst_16 {dimension_numbers = #tpu.dot_dimension_numbers<[1], [0], [0], [1], [0, 0, 1, 1], [], []>} : vector<32x32xbf16>, vector<32x512xbf16>, vector<32x512xf32> -> vector<32x512xf32>
      %c0_17 = arith.constant 0 : index
      %c0_18 = arith.constant 0 : index
      %18 = vector.load %arg6[%c0_17, %c0_18] : memref<32x1xf32, #tpu.memory_space<vmem>>, vector<32x1xf32>
      %19 = vector.broadcast %18 : vector<32x1xf32> to vector<32x512xf32>
      %20 = arith.addf %17, %19 : vector<32x512xf32>
      %cst_19 = arith.constant 0.000000e+00 : f32
      %21 = vector.broadcast %cst_19 : f32 to vector<32x512xf32>
      %22 = arith.maximumf %20, %21 : vector<32x512xf32>
      %c0_20 = arith.constant 0 : index
      %c0_21 = arith.constant 0 : index
      %23 = vector.load %arg7[%c0_20, %c0_21] : memref<32x32xbf16, #tpu.memory_space<vmem>>, vector<32x32xbf16>
      %24 = arith.truncf %22 : vector<32x512xf32> to vector<32x512xbf16>
      %cst_22 = arith.constant dense<0.000000e+00> : vector<32x512xf32>
      %25 = tpu.matmul %23, %24, %cst_22 {dimension_numbers = #tpu.dot_dimension_numbers<[1], [0], [0], [1], [0, 0, 1, 1], [], []>} : vector<32x32xbf16>, vector<32x512xbf16>, vector<32x512xf32> -> vector<32x512xf32>
      %c0_23 = arith.constant 0 : index
      %c0_24 = arith.constant 0 : index
      %26 = vector.load %arg8[%c0_23, %c0_24] : memref<32x1xf32, #tpu.memory_space<vmem>>, vector<32x1xf32>
      %27 = vector.broadcast %26 : vector<32x1xf32> to vector<32x512xf32>
      %28 = arith.addf %25, %27 : vector<32x512xf32>
      %c0_25 = arith.constant 0 : index
      %c0_26 = arith.constant 0 : index
      %29 = vector.load %arg12[%c0_25, %c0_26] : memref<32x512xf32, #tpu.memory_space<vmem>>, vector<32x512xf32>
      tpu.vector_store %arg12[%c0_25, %c0_26], %28 {strides = array<i32>} : memref<32x512xf32, #tpu.memory_space<vmem>>, vector<32x512xf32>,
    } else {
    }
    %c0 = arith.constant 0 : index
    %c0_1 = arith.constant 0 : index
    %3 = vector.load %arg9[%c0, %c0_1] : memref<16x32xbf16, #tpu.memory_space<vmem>>, vector<16x32xbf16>
    %c0_2 = arith.constant 0 : index
    %c0_3 = arith.constant 0 : index
    %4 = vector.load %arg10[%c0_2, %c0_3] : memref<32x512xbf16, #tpu.memory_space<vmem>>, vector<32x512xbf16>
    %cst = arith.constant dense<0.000000e+00> : vector<16x512xf32>
    %5 = tpu.matmul %3, %4, %cst {dimension_numbers = #tpu.dot_dimension_numbers<[1], [0], [0], [1], [0, 0, 1, 1], [], []>} : vector<16x32xbf16>, vector<32x512xbf16>, vector<16x512xf32> -> vector<16x512xf32>
    %c0_4 = arith.constant 0 : index
    %c0_5 = arith.constant 0 : index
    %6 = vector.load %arg11[%c0_4, %c0_5] : memref<16x512xf32, #tpu.memory_space<vmem>>, vector<16x512xf32>
    tpu.vector_store %arg11[%c0_4, %c0_5], %5 {strides = array<i32>} : memref<16x512xf32, #tpu.memory_space<vmem>>, vector<16x512xf32>,
    return
  }
  func.func @transform_0(%arg0: i32, %arg1: i32) -> (i32, i32) {
    %c0_i32 = arith.constant 0 : i32
    %c0_i32_0 = arith.constant 0 : i32
    return %c0_i32, %arg0 : i32, i32
  }
  func.func @transform_1(%arg0: i32, %arg1: i32) -> (i32, i32) {
    %c0_i32 = arith.constant 0 : i32
    %c0_i32_0 = arith.constant 0 : i32
    %c0_i32_1 = arith.constant 0 : i32
    return %c0_i32, %c0_i32_0 : i32, i32
  }
  func.func @transform_2(%arg0: i32, %arg1: i32) -> (i32, i32) {
    %c0_i32 = arith.constant 0 : i32
    %c0_i32_0 = arith.constant 0 : i32
    %c0_i32_1 = arith.constant 0 : i32
    return %c0_i32, %c0_i32_0 : i32, i32
  }
  func.func @transform_3(%arg0: i32, %arg1: i32) -> (i32, i32) {
    %c0_i32 = arith.constant 0 : i32
    %c0_i32_0 = arith.constant 0 : i32
    %c0_i32_1 = arith.constant 0 : i32
    return %c0_i32, %c0_i32_0 : i32, i32
  }
  func.func @transform_4(%arg0: i32, %arg1: i32) -> (i32, i32) {
    %c0_i32 = arith.constant 0 : i32
    %c0_i32_0 = arith.constant 0 : i32
    %c0_i32_1 = arith.constant 0 : i32
    return %c0_i32, %c0_i32_0 : i32, i32
  }
  func.func @transform_5(%arg0: i32, %arg1: i32) -> (i32, i32) {
    %c0_i32 = arith.constant 0 : i32
    %c0_i32_0 = arith.constant 0 : i32
    %c0_i32_1 = arith.constant 0 : i32
    return %c0_i32, %c0_i32_0 : i32, i32
  }
  func.func @transform_6(%arg0: i32, %arg1: i32) -> (i32, i32) {
    %c0_i32 = arith.constant 0 : i32
    %c0_i32_0 = arith.constant 0 : i32
    %c0_i32_1 = arith.constant 0 : i32
    return %c0_i32, %c0_i32_0 : i32, i32
  }
  func.func @transform_7(%arg0: i32, %arg1: i32) -> (i32, i32) {
    %c0_i32 = arith.constant 0 : i32
    %c0_i32_0 = arith.constant 0 : i32
    return %arg1, %c0_i32 : i32, i32
  }
  func.func @transform_8(%arg0: i32, %arg1: i32) -> (i32, i32) {
    %c0_i32 = arith.constant 0 : i32
    %c0_i32_0 = arith.constant 0 : i32
    return %c0_i32, %arg0 : i32, i32
  }
  func.func @transform_9(%arg0: i32, %arg1: i32) -> (i32, i32) {
    %c0_i32 = arith.constant 0 : i32
    return %arg1, %arg0 : i32, i32
  }
  func.func @transform_10(%arg0: i32, %arg1: i32) -> (i32, i32) {
    %c0_i32 = arith.constant 0 : i32
    %c0_i32_0 = arith.constant 0 : i32
    return %c0_i32, %arg0 : i32, i32
  }
}

</mosaic_0001>

<llo_original>
// kernel: tpu_custom_call.1
$region0: #{tpu_custom_call.1}
  #allocation0 [shape = 'u32[]', space=smem, size = 0x4, offset = 0x4, fixed_abs, tag = 'smem constant byte address 0x4 - core index']
  #allocation1 [shape = 'u32[144,128]{1,0:T(1,128)}', space=vmem, size = 0x12000, scoped, tag = 'internal scratch']
  %s0 = inlined_call_operand.hbm [shape: bf16[16,1024], index: 0, kind: input, shape index: {}]
  %s1 = inlined_call_operand.vmem [shape: bf16[32,16], index: 1, kind: input, shape index: {}]
  %s2 = inlined_call_operand.vmem [shape: f32[32,1], index: 2, kind: input, shape index: {}]
  %s3 = inlined_call_operand.vmem [shape: bf16[32,32], index: 3, kind: input, shape index: {}]
  %s4 = inlined_call_operand.vmem [shape: f32[32,1], index: 4, kind: input, shape index: {}]
  %s5 = inlined_call_operand.hbm [shape: bf16[32,32], index: 5, kind: input, shape index: {}]
  %s6 = inlined_call_operand.vmem [shape: f32[32,1], index: 6, kind: input, shape index: {}]
  %s7 = inlined_call_operand.vmem [shape: bf16[16,32], index: 7, kind: input, shape index: {}]
  %s8 = inlined_call_operand.vmem [shape: bf16[32,1024], index: 8, kind: input, shape index: {}]
  %s9 = inlined_call_operand.hbm [shape: f32[16,1024], index: 9, kind: output, shape index: {0}]
  %s10 = inlined_call_operand.hbm [shape: f32[32,1024], index: 10, kind: output, shape index: {1}]
  %11 = xla_tuple %s9, %s10
  %s12 = sld [smem:[#allocation0]]
  $region112: #{tpu_custom_call.1} parent=0
    _
  %s14 = ssub.s32 1, %s12
  %s15 = scalar_select 0, %s14, %s12
  $region1: #{tpu_custom_call.1} parent=0
    #allocation2 [shape = 'u8[32768]{0}', space=vmem, size = 0x8000, scoped, tag = 'input window, operand 0']
    #allocation3 [shape = 's32[2]{0}', space=sflag, size = 0x8, scoped, tag = 'scoped memory for tpu_custom_call.1']
    #allocation4 [shape = 's32[2]{0}', space=sflag, size = 0x8, scoped, tag = 'scoped memory for tpu_custom_call.1']
    #allocation5 [shape = 'u8[8192]{0}', space=vmem, size = 0x2000, scoped, tag = 'input window, operand 5, single buffered']
    #allocation6 [shape = 's32[1]{0}', space=sflag, size = 0x4, scoped, tag = 'scoped memory for tpu_custom_call.1']
    #allocation7 [shape = 'u8[65536]{0}', space=vmem, size = 0x10000, scoped, tag = 'input window, operand 8']
    #allocation8 [shape = 'u8[65536]{0}', space=vmem, size = 0x10000, scoped, tag = 'output window, operand 0']
    #allocation9 [shape = 'u8[131072]{0}', space=vmem, size = 0x20000, scoped, tag = 'output window, operand 1']
    #allocation10 [shape = 's32[2]{0}', space=sflag, size = 0x8, scoped, tag = 'scoped memory for tpu_custom_call.1']
    %16 = vsyncpa [#allocation3], 0
    %s17 = scalar_lea.sflag [#allocation3], 1
    %18 = vsyncpa %s17, 0
    %19 = vsyncpa [#allocation6], 0
    %20 = vsyncpa [#allocation4], 0
    %s21 = scalar_lea.sflag [#allocation4], 1
    %22 = vsyncpa %s21, 0
    %23 = vsyncpa [#allocation10], 0
    %s24 = scalar_lea.sflag [#allocation10], 1
    %25 = vsyncpa %s24, 0
    loop: start=0, step=1, limit=4
    $region2: #{tpu_custom_call.1} parent=1 // loop_pre_header
      _
    $region3: #{tpu_custom_call.1} parent=1 // loop_header
      %s27 = sphi 0, %s31
      %p28 = scmp.ge.s32.totalorder %s27, 4
      %s34 = sphi 0, %s46
      %s35 = sphi 0, %s42
      %s36 = sphi 0, %s34
      %s37 = sphi 0, %s35
      %s38 = sphi 0, %s36
      %s39 = sphi 0, %s37
      %s49 = sphi 0, %s51
      %s52 = sphi 0, %s49
      %s53 = sphi 0, %s52
      %s69 = sphi 0, %s53
      %s73 = sphi 0, %s73
      %s75 = sphi 0, %s73
      %s76 = sphi 0, %s75
      %s90 = sphi 0, %s76
      %s94 = sphi 0, %s94
      %s96 = sphi 0, %s94
      %s97 = sphi 0, %s96
      %s111 = sphi 0, %s97
      %s115 = sphi 0, %s115
      %s117 = sphi 0, %s115
      %s118 = sphi 0, %s117
      %s132 = sphi 0, %s118
      %s136 = sphi 0, %s136
      %s138 = sphi 0, %s136
      %s139 = sphi 0, %s138
      %s153 = sphi 0, %s139
      %s157 = sphi 0, %s157
      %s159 = sphi 0, %s157
      %s160 = sphi 0, %s159
      %s174 = sphi 0, %s160
      %s178 = sphi 0, %s178
      %s180 = sphi 0, %s178
      %s181 = sphi 0, %s180
      %s195 = sphi 0, %s181
      %s201 = sphi 0, %s203
      %s204 = sphi 0, %s201
      %s205 = sphi 0, %s204
      %s221 = sphi 0, %s205
      %s227 = sphi 0, %s229
      %s230 = sphi 0, %s227
      %s231 = sphi 0, %s230
      %s247 = sphi 0, %s231
      %s255 = sphi 0, %s257
      %s258 = sphi 0, %s255
      %s259 = sphi 0, %s258
      %s275 = sphi 0, %s259
      %s281 = sphi 0, %s283
      %s284 = sphi 0, %s281
      %s285 = sphi 0, %s284
      %s301 = sphi 0, %s285
    $region4: #{tpu_custom_call.1} parent=1 // loop_header_branch
      %30 = sbr.rel (%p28) target = $region8
    $region5: #{tpu_custom_call.1} parent=1 // loop_body
      %s32 = ssub.s32 %s27, 1
      %s33 = ssub.s32 %s27, 2
      %s40 = sadd.s32 1, %s35
      %p41 = scmp.ge.s32.totalorder %s40, 1
      %s42 = scalar_select %p41, 0, %s40
      %s43 = sadd.s32 1, %s34
      %s44 = scalar_select %p41, %s43, %s34
      %p45 = scmp.ge.s32.totalorder %s44, 2
      %s46 = scalar_select %p45, 0, %s44
      %s47 = ssub.s32 %s34, %s46
      %p48 = scmp.eq.s32.totalorder %s47, 0
      %s50 = sadd.s32 %s49, 1
      %s51 = scalar_select %p48, %s49, %s50
      %p54 = pneg %p48
      %p55 = scmp.eq.s32.totalorder %s27, 1
      %p56 = por %p54, %p55
      %p57 = scmp.ne.s32.totalorder %s49, %s52
      %p58 = scmp.eq.s32.totalorder %s27, 0
      %p59 = por %p57, %p58
      %p60 = scmp.ne.s32.totalorder %s49, %s52
      %p61 = scmp.eq.s32.totalorder %s32, 1
      %p62 = por %p60, %p61
      %p63 = scmp.ne.s32.totalorder %s52, %s53
      %p64 = scmp.eq.s32.totalorder %s32, 0
      %p65 = por %p63, %p64
      %p66 = scmp.ne.s32.totalorder %s52, %s53
      %p67 = scmp.eq.s32.totalorder %s33, 1
      %p68 = por %p66, %p67
      %p70 = scmp.ne.s32.totalorder %s53, %s69
      %p71 = scmp.eq.s32.totalorder %s33, 0
      %p72 = por %p70, %p71
      %s74 = sadd.s32 %s73, 1
      %p77 = scmp.eq.s32.totalorder %s27, 1
      %p78 = scmp.ne.s32.totalorder %s73, %s75
      %p79 = scmp.eq.s32.totalorder %s27, 0
      %p80 = por %p78, %p79
      %p81 = scmp.ne.s32.totalorder %s73, %s75
      %p82 = scmp.eq.s32.totalorder %s32, 1
      %p83 = por %p81, %p82
      %p84 = scmp.ne.s32.totalorder %s75, %s76
      %p85 = scmp.eq.s32.totalorder %s32, 0
      %p86 = por %p84, %p85
      %p87 = scmp.ne.s32.totalorder %s75, %s76
      %p88 = scmp.eq.s32.totalorder %s33, 1
      %p89 = por %p87, %p88
      %p91 = scmp.ne.s32.totalorder %s76, %s90
      %p92 = scmp.eq.s32.totalorder %s33, 0
      %p93 = por %p91, %p92
      %s95 = sadd.s32 %s94, 1
      %p98 = scmp.eq.s32.totalorder %s27, 1
      %p99 = scmp.ne.s32.totalorder %s94, %s96
      %p100 = scmp.eq.s32.totalorder %s27, 0
      %p101 = por %p99, %p100
      %p102 = scmp.ne.s32.totalorder %s94, %s96
      %p103 = scmp.eq.s32.totalorder %s32, 1
      %p104 = por %p102, %p103
      %p105 = scmp.ne.s32.totalorder %s96, %s97
      %p106 = scmp.eq.s32.totalorder %s32, 0
      %p107 = por %p105, %p106
      %p108 = scmp.ne.s32.totalorder %s96, %s97
      %p109 = scmp.eq.s32.totalorder %s33, 1
      %p110 = por %p108, %p109
      %p112 = scmp.ne.s32.totalorder %s97, %s111
      %p113 = scmp.eq.s32.totalorder %s33, 0
      %p114 = por %p112, %p113
      %s116 = sadd.s32 %s115, 1
      %p119 = scmp.eq.s32.totalorder %s27, 1
      %p120 = scmp.ne.s32.totalorder %s115, %s117
      %p121 = scmp.eq.s32.totalorder %s27, 0
      %p122 = por %p120, %p121
      %p123 = scmp.ne.s32.totalorder %s115, %s117
      %p124 = scmp.eq.s32.totalorder %s32, 1
      %p125 = por %p123, %p124
      %p126 = scmp.ne.s32.totalorder %s117, %s118
      %p127 = scmp.eq.s32.totalorder %s32, 0
      %p128 = por %p126, %p127
      %p129 = scmp.ne.s32.totalorder %s117, %s118
      %p130 = scmp.eq.s32.totalorder %s33, 1
      %p131 = por %p129, %p130
      %p133 = scmp.ne.s32.totalorder %s118, %s132
      %p134 = scmp.eq.s32.totalorder %s33, 0
      %p135 = por %p133, %p134
      %s137 = sadd.s32 %s136, 1
      %p140 = scmp.eq.s32.totalorder %s27, 1
      %p141 = scmp.ne.s32.totalorder %s136, %s138
      %p142 = scmp.eq.s32.totalorder %s27, 0
      %p143 = por %p141, %p142
      %p144 = scmp.ne.s32.totalorder %s136, %s138
      %p145 = scmp.eq.s32.totalorder %s32, 1
      %p146 = por %p144, %p145
      %p147 = scmp.ne.s32.totalorder %s138, %s139
      %p148 = scmp.eq.s32.totalorder %s32, 0
      %p149 = por %p147, %p148
      %p150 = scmp.ne.s32.totalorder %s138, %s139
      %p151 = scmp.eq.s32.totalorder %s33, 1
      %p152 = por %p150, %p151
      %p154 = scmp.ne.s32.totalorder %s139, %s153
      %p155 = scmp.eq.s32.totalorder %s33, 0
      %p156 = por %p154, %p155
      %s158 = sadd.s32 %s157, 1
      %p161 = scmp.eq.s32.totalorder %s27, 1
      %p162 = scmp.ne.s32.totalorder %s157, %s159
      %p163 = scmp.eq.s32.totalorder %s27, 0
      %p164 = por %p162, %p163
      %p165 = scmp.ne.s32.totalorder %s157, %s159
      %p166 = scmp.eq.s32.totalorder %s32, 1
      %p167 = por %p165, %p166
      %p168 = scmp.ne.s32.totalorder %s159, %s160
      %p169 = scmp.eq.s32.totalorder %s32, 0
      %p170 = por %p168, %p169
      %p171 = scmp.ne.s32.totalorder %s159, %s160
      %p172 = scmp.eq.s32.totalorder %s33, 1
      %p173 = por %p171, %p172
      %p175 = scmp.ne.s32.totalorder %s160, %s174
      %p176 = scmp.eq.s32.totalorder %s33, 0
      %p177 = por %p175, %p176
      %s179 = sadd.s32 %s178, 1
      %p182 = scmp.eq.s32.totalorder %s27, 1
      %p183 = scmp.ne.s32.totalorder %s178, %s180
      %p184 = scmp.eq.s32.totalorder %s27, 0
      %p185 = por %p183, %p184
      %p186 = scmp.ne.s32.totalorder %s178, %s180
      %p187 = scmp.eq.s32.totalorder %s32, 1
      %p188 = por %p186, %p187
      %p189 = scmp.ne.s32.totalorder %s180, %s181
      %p190 = scmp.eq.s32.totalorder %s32, 0
      %p191 = por %p189, %p190
      %p192 = scmp.ne.s32.totalorder %s180, %s181
      %p193 = scmp.eq.s32.totalorder %s33, 1
      %p194 = por %p192, %p193
      %p196 = scmp.ne.s32.totalorder %s181, %s195
      %p197 = scmp.eq.s32.totalorder %s33, 0
      %p198 = por %p196, %p197
      %s199 = ssub.s32 %s35, %s42
      %p200 = scmp.eq.s32.totalorder %s199, 0
      %s202 = sadd.s32 %s201, 1
      %s203 = scalar_select %p200, %s201, %s202
      %p206 = pneg %p200
      %p207 = scmp.eq.s32.totalorder %s27, 1
      %p208 = por %p206, %p207
      %p209 = scmp.ne.s32.totalorder %s201, %s204
      %p210 = scmp.eq.s32.totalorder %s27, 0
      %p211 = por %p209, %p210
      %p212 = scmp.ne.s32.totalorder %s201, %s204
      %p213 = scmp.eq.s32.totalorder %s32, 1
      %p214 = por %p212, %p213
      %p215 = scmp.ne.s32.totalorder %s204, %s205
      %p216 = scmp.eq.s32.totalorder %s32, 0
      %p217 = por %p215, %p216
      %p218 = scmp.ne.s32.totalorder %s204, %s205
      %p219 = scmp.eq.s32.totalorder %s33, 1
      %p220 = por %p218, %p219
      %p222 = scmp.ne.s32.totalorder %s205, %s221
      %p223 = scmp.eq.s32.totalorder %s33, 0
      %p224 = por %p222, %p223
      %s225 = ssub.s32 %s34, %s46
      %p226 = scmp.eq.s32.totalorder %s225, 0
      %s228 = sadd.s32 %s227, 1
      %s229 = scalar_select %p226, %s227, %s228
      %p232 = pneg %p226
      %p233 = scmp.eq.s32.totalorder %s27, 1
      %p234 = por %p232, %p233
      %p235 = scmp.ne.s32.totalorder %s227, %s230
      %p236 = scmp.eq.s32.totalorder %s27, 0
      %p237 = por %p235, %p236
      %p238 = scmp.ne.s32.totalorder %s227, %s230
      %p239 = scmp.eq.s32.totalorder %s32, 1
      %p240 = por %p238, %p239
      %p241 = scmp.ne.s32.totalorder %s230, %s231
      %p242 = scmp.eq.s32.totalorder %s32, 0
      %p243 = por %p241, %p242
      %p244 = scmp.ne.s32.totalorder %s230, %s231
      %p245 = scmp.eq.s32.totalorder %s33, 1
      %p246 = por %p244, %p245
      %p248 = scmp.ne.s32.totalorder %s231, %s247
      %p249 = scmp.eq.s32.totalorder %s33, 0
      %p250 = por %p248, %p249
      %s251 = ssub.s32 %s35, %s42
      %s252 = ssub.s32 %s34, %s46
      %s253 = sor.u32 %s251, %s252
      %p254 = scmp.eq.s32.totalorder %s253, 0
      %s256 = sadd.s32 %s255, 1
      %s257 = scalar_select %p254, %s255, %s256
      %p260 = pneg %p254
      %p261 = scmp.eq.s32.totalorder %s27, 1
      %p262 = por %p260, %p261
      %p263 = scmp.ne.s32.totalorder %s255, %s258
      %p264 = scmp.eq.s32.totalorder %s27, 0
      %p265 = por %p263, %p264
      %p266 = scmp.ne.s32.totalorder %s255, %s258
      %p267 = scmp.eq.s32.totalorder %s32, 1
      %p268 = por %p266, %p267
      %p269 = scmp.ne.s32.totalorder %s258, %s259
      %p270 = scmp.eq.s32.totalorder %s32, 0
      %p271 = por %p269, %p270
      %p272 = scmp.ne.s32.totalorder %s258, %s259
      %p273 = scmp.eq.s32.totalorder %s33, 1
      %p274 = por %p272, %p273
      %p276 = scmp.ne.s32.totalorder %s259, %s275
      %p277 = scmp.eq.s32.totalorder %s33, 0
      %p278 = por %p276, %p277
      %s279 = ssub.s32 %s34, %s46
      %p280 = scmp.eq.s32.totalorder %s279, 0
      %s282 = sadd.s32 %s281, 1
      %s283 = scalar_select %p280, %s281, %s282
      %p286 = pneg %p280
      %p287 = scmp.eq.s32.totalorder %s27, 1
      %p288 = por %p286, %p287
      %p289 = scmp.ne.s32.totalorder %s281, %s284
      %p290 = scmp.eq.s32.totalorder %s27, 0
      %p291 = por %p289, %p290
      %p292 = scmp.ne.s32.totalorder %s281, %s284
      %p293 = scmp.eq.s32.totalorder %s32, 1
      %p294 = por %p292, %p293
      %p295 = scmp.ne.s32.totalorder %s284, %s285
      %p296 = scmp.eq.s32.totalorder %s32, 0
      %p297 = por %p295, %p296
      %p298 = scmp.ne.s32.totalorder %s284, %s285
      %p299 = scmp.eq.s32.totalorder %s33, 1
      %p300 = por %p298, %p299
      %p302 = scmp.ne.s32.totalorder %s285, %s301
      %p303 = scmp.eq.s32.totalorder %s33, 0
      %p304 = por %p302, %p303
      %p305 = scmp.le.s32.totalorder 1, %s27
      %p306 = scmp.lt.s32.totalorder %s27, 3
      %p307 = pnand %p305, %p306
      %p308 = pneg %p307
      // Predicated region
      $region9: #{tpu_custom_call.1} parent=5 // pred_check
        _
      $region10: #{tpu_custom_call.1} parent=5 // pred_check_branch
        %310 = sbr.rel (%p307) target = $region12
      $region11: #{tpu_custom_call.1} parent=5 // pred_region
        %s311 = ssub.s32 %s27, 1
        // Predicated region
        $region13: #{tpu_custom_call.1} parent=11 // pred_check
          %p312 = pneg %p86
        $region14: #{tpu_custom_call.1} parent=11 // pred_check_branch
          %314 = sbr.rel (%p312) target = $region16
        $region15: #{tpu_custom_call.1} parent=11 // pred_region
          _
        $region16: #{tpu_custom_call.1} parent=11 // pred_fallthru
          _
        // Predicated region
        $region17: #{tpu_custom_call.1} parent=11 // pred_check
          %p315 = pneg %p107
        $region18: #{tpu_custom_call.1} parent=11 // pred_check_branch
          %317 = sbr.rel (%p315) target = $region20
        $region19: #{tpu_custom_call.1} parent=11 // pred_region
          _
        $region20: #{tpu_custom_call.1} parent=11 // pred_fallthru
          _
        // Predicated region
        $region21: #{tpu_custom_call.1} parent=11 // pred_check
          %p318 = pneg %p128
        $region22: #{tpu_custom_call.1} parent=11 // pred_check_branch
          %320 = sbr.rel (%p318) target = $region24
        $region23: #{tpu_custom_call.1} parent=11 // pred_region
          _
        $region24: #{tpu_custom_call.1} parent=11 // pred_fallthru
          _
        // Predicated region
        $region25: #{tpu_custom_call.1} parent=11 // pred_check
          %p321 = pneg %p149
        $region26: #{tpu_custom_call.1} parent=11 // pred_check_branch
          %323 = sbr.rel (%p321) target = $region28
        $region27: #{tpu_custom_call.1} parent=11 // pred_region
          _
        $region28: #{tpu_custom_call.1} parent=11 // pred_fallthru
          _
        // Predicated region
        $region29: #{tpu_custom_call.1} parent=11 // pred_check
          %p324 = pneg %p170
        $region30: #{tpu_custom_call.1} parent=11 // pred_check_branch
          %326 = sbr.rel (%p324) target = $region32
        $region31: #{tpu_custom_call.1} parent=11 // pred_region
          %s328 = ssub.s32 256, 256
          %329 = vsyncadd [#allocation6], %s328
          %s330 = sshll.u32 [#allocation5], 4
          %s331 = int_to_ptr.vmem [resolvable:$true] %s330
          %336 = dma.hbm_to_vmem [thread:$0]  %s5, 256, %s331, [#allocation6], 64, 64, 4
        $region32: #{tpu_custom_call.1} parent=11 // pred_fallthru
          _
        // Predicated region
        $region33: #{tpu_custom_call.1} parent=11 // pred_check
          %p337 = pneg %p191
        $region34: #{tpu_custom_call.1} parent=11 // pred_check_branch
          %339 = sbr.rel (%p337) target = $region36
        $region35: #{tpu_custom_call.1} parent=11 // pred_region
          _
        $region36: #{tpu_custom_call.1} parent=11 // pred_fallthru
          _
        // Predicated region
        $region37: #{tpu_custom_call.1} parent=11 // pred_check
          %p340 = pneg %p217
        $region38: #{tpu_custom_call.1} parent=11 // pred_check_branch
          %342 = sbr.rel (%p340) target = $region40
        $region39: #{tpu_custom_call.1} parent=11 // pred_region
          %s343 = smul.u32 2, %s37
          %p344 = scmp.lt.s32.totalorder %s343, 1
          %s345 = scalar_select %p344, %s343, 1
          %s346 = smul.addr %s345, 4
          %s347 = scalar_lea.vmem %s7, %s346
          %s348 = smul.u32 2, %s37
        $region40: #{tpu_custom_call.1} parent=11 // pred_fallthru
          _
      $region12: #{tpu_custom_call.1} parent=5 // pred_fallthru
        _
      %p349 = scmp.lt.s32.totalorder %s27, 2
      // Predicated region
      $region41: #{tpu_custom_call.1} parent=5 // pred_check
        %p350 = pneg %p349
      $region42: #{tpu_custom_call.1} parent=5 // pred_check_branch
        %352 = sbr.rel (%p350) target = $region44
      $region43: #{tpu_custom_call.1} parent=5 // pred_region
        // Predicated region
        $region45: #{tpu_custom_call.1} parent=43 // pred_check
          %p353 = pneg %p59
        $region46: #{tpu_custom_call.1} parent=43 // pred_check_branch
          %355 = sbr.rel (%p353) target = $region48
        $region47: #{tpu_custom_call.1} parent=43 // pred_region
          %s356 = sand.u32 %s49, 1
          %s357 = scalar_lea.sflag [#allocation3], %s356
          %s358 = sand.u32 %s49, 1
          %s359 = smul.addr %s358, 32
          %s360 = scalar_lea.vmem [#allocation2], %s359
          %s361 = smul.u32 4, %s34
          %s363 = ssub.s32 512, 512
          %364 = vsyncadd %s357, %s363
          %s365 = smul.addr %s361, 64
          %s366 = scalar_lea.hbm %s0, %s365
          %s367 = sshll.u32 %s360, 4
          %s368 = int_to_ptr.vmem [resolvable:$true] %s367
          %373 = dma.hbm_to_vmem [thread:$0]  %s366, 512, %s368, %s357, 512, 256, 16
        $region48: #{tpu_custom_call.1} parent=43 // pred_fallthru
          _
        // Predicated region
        $region49: #{tpu_custom_call.1} parent=43 // pred_check
          %p374 = pneg %p237
        $region50: #{tpu_custom_call.1} parent=43 // pred_check_branch
          %376 = sbr.rel (%p374) target = $region52
        $region51: #{tpu_custom_call.1} parent=43 // pred_region
          %s377 = sand.u32 %s227, 1
          %s378 = sand.u32 %s227, 1
          %s379 = smul.addr %s378, 64
          %s380 = scalar_lea.vmem [#allocation7], %s379
          %s381 = smul.u32 4, %s34
          %s382 = smul.addr %s381, 4
          %s383 = scalar_lea.vmem %s8, %s382
          // Predicated region
          $region53: #{tpu_custom_call.1} parent=51 // pred_check
            _
          $region54: #{tpu_custom_call.1} parent=51 // pred_check_branch
            %385 = sbr.rel (0) target = $region56
          $region55: #{tpu_custom_call.1} parent=51 // pred_region
            // Predicated region
            $region57: #{tpu_custom_call.1} parent=55 // pred_check
              _
            $region58: #{tpu_custom_call.1} parent=55 // pred_check_branch
              %387 = sbr.rel (0) target = $region60
            $region59: #{tpu_custom_call.1} parent=55 // pred_region
              loop: start=0, step=1, limit=1
              $region61: #{tpu_custom_call.1} parent=59 // loop_pre_header
                _
              $region62: #{tpu_custom_call.1} parent=59 // loop_header
                %s389 = sphi 0, %s393
                %p390 = scmp.ge.s32.totalorder %s389, 1
                %s394 = sphi %s383, %s383
                %s395 = sphi %s380, %s380
              $region63: #{tpu_custom_call.1} parent=59 // loop_header_branch
                %392 = sbr.rel (%p390) target = $region67
              $region64: #{tpu_custom_call.1} parent=59 // loop_body
                %v396 = vld [vmem:[%s394] sm:$0xff]
                %397 = vst [vmem:[%s395] sm:$0xff] %v396
                %v398 = vld [vmem:[%s394 + $0x8] sm:$0xff]
                %399 = vst [vmem:[%s395 + $0x8] sm:$0xff] %v398
                %v400 = vld [vmem:[%s394 + $0x20] sm:$0xff]
                %401 = vst [vmem:[%s395 + $0x10] sm:$0xff] %v400
                %v402 = vld [vmem:[%s394 + $0x28] sm:$0xff]
                %403 = vst [vmem:[%s395 + $0x18] sm:$0xff] %v402
                %v404 = vld [vmem:[%s394 + $0x40] sm:$0xff]
                %405 = vst [vmem:[%s395 + $0x20] sm:$0xff] %v404
                %v406 = vld [vmem:[%s394 + $0x48] sm:$0xff]
                %407 = vst [vmem:[%s395 + $0x28] sm:$0xff] %v406
                %v408 = vld [vmem:[%s394 + $0x60] sm:$0xff]
                %409 = vst [vmem:[%s395 + $0x30] sm:$0xff] %v408
                %v410 = vld [vmem:[%s394 + $0x68] sm:$0xff]
                %411 = vst [vmem:[%s395 + $0x38] sm:$0xff] %v410
              $region65: #{tpu_custom_call.1} parent=59 // loop_footer
                %s393 = sadd.s32 1, %s389
              $region66: #{tpu_custom_call.1} parent=59 // loop_footer_branch
                %388 = sbr.rel target = $region62
              $region67: #{tpu_custom_call.1} parent=59 // loop_exit
                _
            $region60: #{tpu_custom_call.1} parent=55 // pred_fallthru
              _
            // Predicated region
            $region68: #{tpu_custom_call.1} parent=55 // pred_check
              _
            $region69: #{tpu_custom_call.1} parent=55 // pred_check_branch
              %413 = sbr.rel target = $region71
            $region70: #{tpu_custom_call.1} parent=55 // pred_region
              _
            $region71: #{tpu_custom_call.1} parent=55 // pred_fallthru
              _
          $region56: #{tpu_custom_call.1} parent=51 // pred_fallthru
            _
          %414 = vnop
        $region52: #{tpu_custom_call.1} parent=43 // pred_fallthru
          _
      $region44: #{tpu_custom_call.1} parent=5 // pred_fallthru
        _
      %p415 = scmp.le.s32.totalorder 1, %s27
      %p416 = scmp.lt.s32.totalorder %s27, 3
      %p417 = pnand %p415, %p416
      %p418 = pneg %p417
      // Predicated region
      $region72: #{tpu_custom_call.1} parent=5 // pred_check
        _
      $region73: #{tpu_custom_call.1} parent=5 // pred_check_branch
        %420 = sbr.rel (%p417) target = $region75
      $region74: #{tpu_custom_call.1} parent=5 // pred_region
        %s421 = ssub.s32 %s27, 1
        %s422 = sand.u32 %s52, 1
        %s423 = scalar_lea.sflag [#allocation3], %s422
        %s424 = sand.u32 %s52, 1
        %s425 = smul.addr %s424, 32
        %s426 = scalar_lea.vmem [#allocation2], %s425
        // Predicated region
        $region76: #{tpu_custom_call.1} parent=74 // pred_check
          %p427 = pneg %p65
        $region77: #{tpu_custom_call.1} parent=74 // pred_check_branch
          %429 = sbr.rel (%p427) target = $region79
        $region78: #{tpu_custom_call.1} parent=74 // pred_region
          %430 = dma.done %s423, 512
        $region79: #{tpu_custom_call.1} parent=74 // pred_fallthru
          _
        // Predicated region
        $region80: #{tpu_custom_call.1} parent=74 // pred_check
          %p431 = pneg %p170
        $region81: #{tpu_custom_call.1} parent=74 // pred_check_branch
          %433 = sbr.rel (%p431) target = $region83
        $region82: #{tpu_custom_call.1} parent=74 // pred_region
          %434 = dma.done [#allocation6], 256
        $region83: #{tpu_custom_call.1} parent=74 // pred_fallthru
          _
        %s435 = sand.u32 %s230, 1
        %s436 = sand.u32 %s230, 1
        %s437 = smul.addr %s436, 64
        %s438 = scalar_lea.vmem [#allocation7], %s437
        // Predicated region
        $region84: #{tpu_custom_call.1} parent=74 // pred_check
          %p439 = pneg %p243
        $region85: #{tpu_custom_call.1} parent=74 // pred_check_branch
          %441 = sbr.rel (%p439) target = $region87
        $region86: #{tpu_custom_call.1} parent=74 // pred_region
          _
        $region87: #{tpu_custom_call.1} parent=74 // pred_fallthru
          _
        %s442 = sand.u32 %s52, 1
        %s443 = scalar_lea.sflag [#allocation3], %s442
        %s444 = sand.u32 %s52, 1
        %s445 = smul.addr %s444, 32
        %s446 = scalar_lea.vmem [#allocation2], %s445
        %p447 = pneg %p65
        %p448 = pneg %p62
        %p449 = pneg %p86
        %p450 = pneg %p83
        %p451 = pneg %p107
        %p452 = pneg %p104
        %p453 = pneg %p128
        %p454 = pneg %p125
        %p455 = pneg %p149
        %p456 = pneg %p146
        %p457 = pneg %p170
        %p458 = pneg %p167
        %p459 = pneg %p191
        %p460 = pneg %p188
        %s461 = smul.u32 2, %s37
        %p462 = scmp.lt.s32.totalorder %s461, 1
        %s463 = scalar_select %p462, %s461, 1
        %s464 = smul.addr %s463, 4
        %s465 = scalar_lea.vmem %s7, %s464
        %p466 = pneg %p217
        %p467 = pneg %p214
        %s468 = sand.u32 %s230, 1
        %s469 = sand.u32 %s230, 1
        %s470 = smul.addr %s469, 64
        %s471 = scalar_lea.vmem [#allocation7], %s470
        %p472 = pneg %p243
        %p473 = pneg %p240
        %p474 = pneg %p271
        %p475 = pneg %p268
        %s476 = sand.u32 %s258, 1
        %s477 = scalar_lea.sflag [#allocation4], %s476
        %s478 = sand.u32 %s258, 1
        %s479 = smul.addr %s478, 64
        %s480 = scalar_lea.vmem [#allocation8], %s479
        %p481 = pneg %p297
        %p482 = pneg %p294
        %s483 = sand.u32 %s284, 1
        %s484 = scalar_lea.sflag [#allocation10], %s483
        %s485 = sand.u32 %s284, 1
        %s486 = smul.addr %s485, 128
        %s487 = scalar_lea.vmem [#allocation9], %s486
        %s488 = smul.u32 4, %s36
        %s489 = smul.u32 2, %s37
        %p490 = scmp.lt.s32.totalorder %s489, 1
        %s491 = scalar_select %p490, %s489, 1
        %s492 = smul.addr %s491, 4
        %s493 = scalar_lea.vmem %s7, %s492
        %s494 = smul.u32 2, %s37
        %s495 = smul.u32 4, %s36
        %s496 = smul.u32 2, %s37
        %s497 = smul.u32 4, %s36
        %s498 = smul.u32 4, %s36
        %p500 = scmp.eq.s32.totalorder %s37, 0
        // Predicated region
        $region88: #{tpu_custom_call.1} parent=74 // pred_check
          %p501 = pneg %p500
        $region89: #{tpu_custom_call.1} parent=74 // pred_check_branch
          %503 = sbr.rel (%p501) target = $region91
        $region90: #{tpu_custom_call.1} parent=74 // pred_region
          %v504 = vld [vmem:[%s1] sm:$0xf]
          %v505 = vld [vmem:[%s1 + $0x4] sm:$0xf]
          %v506 = vld [vmem:[%s1 + $0x8] sm:$0xf]
          %v507 = vld [vmem:[%s1 + $0xc] sm:$0xf]
          %v508 = vld [vmem:[%s426] sm:$0xff]
          %v509 = vld [vmem:[%s426 + $0x8] sm:$0xff]
          %v510 = vld [vmem:[%s426 + $0x10] sm:$0xff]
          %v511 = vld [vmem:[%s426 + $0x18] sm:$0xff]
          %v512 = vld [vmem:[%s2] sm:$0xff]
          %v513 = vld [vmem:[%s2 + $0x8] sm:$0xff]
          %v514 = vld [vmem:[%s2 + $0x10] sm:$0xff]
          %v515 = vld [vmem:[%s2 + $0x18] sm:$0xff]
          %517 = vset.pattern.permute.xlu0 0
          %518 = vperm.xlu0 %517, %v512
          %v519 = vpop.permute.xlu0 %518
          %522 = vset.pattern.permute.xlu0 0
          %523 = vperm.xlu0 %522, %v513
          %v524 = vpop.permute.xlu0 %523
          %527 = vset.pattern.permute.xlu0 0
          %528 = vperm.xlu0 %527, %v514
          %v529 = vpop.permute.xlu0 %528
          %532 = vset.pattern.permute.xlu0 0
          %533 = vperm.xlu0 %532, %v515
          %v534 = vpop.permute.xlu0 %533
          %v540 = vunpack.c.l.b16 %v504
          %v541 = vunpack.c.l.b16 %v505
          %v542 = vunpack.c.l.b16 %v506
          %v543 = vunpack.c.l.b16 %v507
          %v544 = vpack.c.b16 %v541, %v540
          %v545 = vpack.c.b16 %v543, %v542
          %v550 = vunpack.c.l.b16 %v508
          %v551 = vunpack.c.h.b16 %v508
          %v552 = vunpack.c.l.b16 %v509
          %v553 = vunpack.c.h.b16 %v509
          %v554 = vunpack.c.l.b16 %v510
          %v555 = vunpack.c.h.b16 %v510
          %v556 = vunpack.c.l.b16 %v511
          %v557 = vunpack.c.h.b16 %v511
          %v558 = vpack.c.b16 %v554, %v550
          %v559 = vpack.c.b16 %v555, %v551
          %v560 = vpack.c.b16 %v556, %v552
          %v561 = vpack.c.b16 %v557, %v553
          %vm566 = vcmask 130048
          %v568 = vsel %vm566, %v544, 0
          %v571 = vsel %vm566, %v545, 0
          %573 = vmatprep.subr.bf16.mxu0 %v559
          %574 = vmatpush1.bf16.msra.mxu0 %v558
          %575 = vmatprep.subr.bf16.mxu0 0
          %576 = vmatpush1.bf16.msra.mxu0 0
          %577 = vmatprep.subr.bf16.mxu0 0
          %578 = vmatpush1.bf16.msra.mxu0 0
          %579 = vmatprep.subr.bf16.mxu0 0
          %580 = vmatpush1.bf16.msra.mxu0 0
          %581 = vmatprep.subr.bf16.mxu0 0
          %582 = vmatpush1.bf16.msra.mxu0 0
          %583 = vmatprep.subr.bf16.mxu0 0
          %584 = vmatpush1.bf16.msra.mxu0 0
          %585 = vmatprep.subr.bf16.mxu0 0
          %586 = vmatpush1.bf16.msra.mxu0 0
          %587 = vmatprep.subr.bf16.mxu0 0
          %588 = vmatpush1.bf16.msra.mxu0 0
          %589 = vmatprep.subr.bf16.mxu0 0
          %590 = vmatpush1.bf16.msra.mxu0 0
          %591 = vmatprep.subr.bf16.mxu0 0
          %592 = vmatpush1.bf16.msra.mxu0 0
          %593 = vmatprep.subr.bf16.mxu0 0
          %594 = vmatpush1.bf16.msra.mxu0 0
          %595 = vmatprep.subr.bf16.mxu0 0
          %596 = vmatpush1.bf16.msra.mxu0 0
          %597 = vmatprep.subr.bf16.mxu0 0
          %598 = vmatpush1.bf16.msra.mxu0 0
          %599 = vmatprep.subr.bf16.mxu0 0
          %600 = vmatpush1.bf16.msra.mxu0 0
          %601 = vmatprep.subr.bf16.mxu0 0
          %602 = vmatpush1.bf16.msra.mxu0 0
          %603 = vmatprep.subr.bf16.mxu0 0
          %604 = vmatpush1.bf16.msra.mxu0 0
          %605 = vmatprep.mubr.bf16.mxu0 0
          %606 = vmatmul.mubr.bf16.gmra.mrb[0].mxu0 %v568
          %v607 = vpop.f32.mrb[0].mxu0
          %v608 = vadd.f32 %v519, %v607
          %v609 = vpop.f32.mrb[0].mxu0
          %v610 = vadd.f32 %v519, %v609
          %v611 = vpop.f32.mrb[0].mxu0
          %v612 = vadd.f32 %v524, %v611
          %v613 = vpop.f32.mrb[0].mxu0
          %v614 = vadd.f32 %v524, %v613
          %615 = vmatprep.mubr.bf16.mxu0 0
          %616 = vmatmul.mubr.bf16.gmra.mrb[0].mxu0 %v571
          %v617 = vpop.f32.mrb[0].mxu0
          %v618 = vadd.f32 %v529, %v617
          %v619 = vpop.f32.mrb[0].mxu0
          %v620 = vadd.f32 %v529, %v619
          %v621 = vpop.f32.mrb[0].mxu0
          %v622 = vadd.f32 %v534, %v621
          %v623 = vpop.f32.mrb[0].mxu0
          %v624 = vadd.f32 %v534, %v623
          %625 = vdwg.mxu0
          %626 = vmatprep.subr.bf16.mxu0 %v561
          %627 = vmatpush1.bf16.msra.mxu0 %v560
          %628 = vmatprep.subr.bf16.mxu0 0
          %629 = vmatpush1.bf16.msra.mxu0 0
          %630 = vmatprep.subr.bf16.mxu0 0
          %631 = vmatpush1.bf16.msra.mxu0 0
          %632 = vmatprep.subr.bf16.mxu0 0
          %633 = vmatpush1.bf16.msra.mxu0 0
          %634 = vmatprep.subr.bf16.mxu0 0
          %635 = vmatpush1.bf16.msra.mxu0 0
          %636 = vmatprep.subr.bf16.mxu0 0
          %637 = vmatpush1.bf16.msra.mxu0 0
          %638 = vmatprep.subr.bf16.mxu0 0
          %639 = vmatpush1.bf16.msra.mxu0 0
          %640 = vmatprep.subr.bf16.mxu0 0
          %641 = vmatpush1.bf16.msra.mxu0 0
          %642 = vmatprep.subr.bf16.mxu0 0
          %643 = vmatpush1.bf16.msra.mxu0 0
          %644 = vmatprep.subr.bf16.mxu0 0
          %645 = vmatpush1.bf16.msra.mxu0 0
          %646 = vmatprep.subr.bf16.mxu0 0
          %647 = vmatpush1.bf16.msra.mxu0 0
          %648 = vmatprep.subr.bf16.mxu0 0
          %649 = vmatpush1.bf16.msra.mxu0 0
          %650 = vmatprep.subr.bf16.mxu0 0
          %651 = vmatpush1.bf16.msra.mxu0 0
          %652 = vmatprep.subr.bf16.mxu0 0
          %653 = vmatpush1.bf16.msra.mxu0 0
          %654 = vmatprep.subr.bf16.mxu0 0
          %655 = vmatpush1.bf16.msra.mxu0 0
          %656 = vmatprep.subr.bf16.mxu0 0
          %657 = vmatpush1.bf16.msra.mxu0 0
          %658 = vmatprep.mubr.bf16.mxu0 0
          %659 = vmatmul.mubr.bf16.gmra.mrb[0].mxu0 %v568
          %v660 = vpop.f32.mrb[0].mxu0
          %v661 = vadd.f32 %v519, %v660
          %v662 = vpop.f32.mrb[0].mxu0
          %v663 = vadd.f32 %v519, %v662
          %v664 = vpop.f32.mrb[0].mxu0
          %v665 = vadd.f32 %v524, %v664
          %v666 = vpop.f32.mrb[0].mxu0
          %v667 = vadd.f32 %v524, %v666
          %668 = vmatprep.mubr.bf16.mxu0 0
          %669 = vmatmul.mubr.bf16.gmra.mrb[0].mxu0 %v571
          %v670 = vpop.f32.mrb[0].mxu0
          %v671 = vadd.f32 %v529, %v670
          %v672 = vpop.f32.mrb[0].mxu0
          %v673 = vadd.f32 %v529, %v672
          %v674 = vpop.f32.mrb[0].mxu0
          %v675 = vadd.f32 %v534, %v674
          %v676 = vpop.f32.mrb[0].mxu0
          %v677 = vadd.f32 %v534, %v676
          %678 = vdwg.mxu0
          %v679 = vmax.f32 %v608, 0.0
          %v680 = vmax.f32 %v610, 0.0
          %v681 = vmax.f32 %v661, 0.0
          %v682 = vmax.f32 %v663, 0.0
          %v683 = vmax.f32 %v612, 0.0
          %v684 = vmax.f32 %v614, 0.0
          %v685 = vmax.f32 %v665, 0.0
          %v686 = vmax.f32 %v667, 0.0
          %v687 = vmax.f32 %v618, 0.0
          %v688 = vmax.f32 %v620, 0.0
          %v689 = vmax.f32 %v671, 0.0
          %v690 = vmax.f32 %v673, 0.0
          %v691 = vmax.f32 %v622, 0.0
          %v692 = vmax.f32 %v624, 0.0
          %v693 = vmax.f32 %v675, 0.0
          %v694 = vmax.f32 %v677, 0.0
          %v695 = vld [vmem:[%s3] sm:$0xf]
          %v696 = vld [vmem:[%s3 + $0x4] sm:$0xf]
          %v697 = vld [vmem:[%s3 + $0x8] sm:$0xf]
          %v698 = vld [vmem:[%s3 + $0xc] sm:$0xf]
          %v699 = vpack.c.bf16 %v683, %v679
          %v700 = vpack.c.bf16 %v684, %v680
          %v701 = vpack.c.bf16 %v685, %v681
          %v702 = vpack.c.bf16 %v686, %v682
          %v703 = vpack.c.bf16 %v691, %v687
          %v704 = vpack.c.bf16 %v692, %v688
          %v705 = vpack.c.bf16 %v693, %v689
          %v706 = vpack.c.bf16 %v694, %v690
          %v707 = vld [vmem:[%s4] sm:$0xff]
          %v708 = vld [vmem:[%s4 + $0x8] sm:$0xff]
          %v709 = vld [vmem:[%s4 + $0x10] sm:$0xff]
          %v710 = vld [vmem:[%s4 + $0x18] sm:$0xff]
          %712 = vset.pattern.permute.xlu0 0
          %713 = vperm.xlu0 %712, %v707
          %v714 = vpop.permute.xlu0 %713
          %717 = vset.pattern.permute.xlu0 0
          %718 = vperm.xlu0 %717, %v708
          %v719 = vpop.permute.xlu0 %718
          %722 = vset.pattern.permute.xlu0 0
          %723 = vperm.xlu0 %722, %v709
          %v724 = vpop.permute.xlu0 %723
          %727 = vset.pattern.permute.xlu0 0
          %728 = vperm.xlu0 %727, %v710
          %v729 = vpop.permute.xlu0 %728
          %v735 = vunpack.c.l.b16 %v695
          %v736 = vunpack.c.l.b16 %v696
          %v737 = vunpack.c.l.b16 %v697
          %v738 = vunpack.c.l.b16 %v698
          %v739 = vpack.c.b16 %v736, %v735
          %v740 = vpack.c.b16 %v738, %v737
          %vm741 = vcmask 261120
          %v743 = vsel %vm741, %v739, 0
          %v746 = vsel %vm741, %v740, 0
          %748 = vmatprep.subr.bf16.mxu0 %v700
          %749 = vmatpush1.bf16.msra.mxu0 %v699
          %750 = vmatprep.subr.bf16.mxu0 %v704
          %751 = vmatpush1.bf16.msra.mxu0 %v703
          %752 = vmatprep.subr.bf16.mxu0 0
          %753 = vmatpush1.bf16.msra.mxu0 0
          %754 = vmatprep.subr.bf16.mxu0 0
          %755 = vmatpush1.bf16.msra.mxu0 0
          %756 = vmatprep.subr.bf16.mxu0 0
          %757 = vmatpush1.bf16.msra.mxu0 0
          %758 = vmatprep.subr.bf16.mxu0 0
          %759 = vmatpush1.bf16.msra.mxu0 0
          %760 = vmatprep.subr.bf16.mxu0 0
          %761 = vmatpush1.bf16.msra.mxu0 0
          %762 = vmatprep.subr.bf16.mxu0 0
          %763 = vmatpush1.bf16.msra.mxu0 0
          %764 = vmatprep.subr.bf16.mxu0 0
          %765 = vmatpush1.bf16.msra.mxu0 0
          %766 = vmatprep.subr.bf16.mxu0 0
          %767 = vmatpush1.bf16.msra.mxu0 0
          %768 = vmatprep.subr.bf16.mxu0 0
          %769 = vmatpush1.bf16.msra.mxu0 0
          %770 = vmatprep.subr.bf16.mxu0 0
          %771 = vmatpush1.bf16.msra.mxu0 0
          %772 = vmatprep.subr.bf16.mxu0 0
          %773 = vmatpush1.bf16.msra.mxu0 0
          %774 = vmatprep.subr.bf16.mxu0 0
          %775 = vmatpush1.bf16.msra.mxu0 0
          %776 = vmatprep.subr.bf16.mxu0 0
          %777 = vmatpush1.bf16.msra.mxu0 0
          %778 = vmatprep.subr.bf16.mxu0 0
          %779 = vmatpush1.bf16.msra.mxu0 0
          %780 = vmatprep.mubr.bf16.mxu0 0
          %781 = vmatmul.mubr.bf16.gmra.mrb[0].mxu0 %v743
          %v782 = vpop.f32.mrb[0].mxu0
          %v783 = vadd.f32 %v714, %v782
          %v784 = vpop.f32.mrb[0].mxu0
          %v785 = vadd.f32 %v714, %v784
          %v786 = vpop.f32.mrb[0].mxu0
          %v787 = vadd.f32 %v719, %v786
          %v788 = vpop.f32.mrb[0].mxu0
          %v789 = vadd.f32 %v719, %v788
          %790 = vmatprep.mubr.bf16.mxu0 0
          %791 = vmatmul.mubr.bf16.gmra.mrb[0].mxu0 %v746
          %v792 = vpop.f32.mrb[0].mxu0
          %v793 = vadd.f32 %v724, %v792
          %v794 = vpop.f32.mrb[0].mxu0
          %v795 = vadd.f32 %v724, %v794
          %v796 = vpop.f32.mrb[0].mxu0
          %v797 = vadd.f32 %v729, %v796
          %v798 = vpop.f32.mrb[0].mxu0
          %v799 = vadd.f32 %v729, %v798
          %800 = vdwg.mxu0
          %801 = vmatprep.subr.bf16.mxu0 %v702
          %802 = vmatpush1.bf16.msra.mxu0 %v701
          %803 = vmatprep.subr.bf16.mxu0 %v706
          %804 = vmatpush1.bf16.msra.mxu0 %v705
          %805 = vmatprep.subr.bf16.mxu0 0
          %806 = vmatpush1.bf16.msra.mxu0 0
          %807 = vmatprep.subr.bf16.mxu0 0
          %808 = vmatpush1.bf16.msra.mxu0 0
          %809 = vmatprep.subr.bf16.mxu0 0
          %810 = vmatpush1.bf16.msra.mxu0 0
          %811 = vmatprep.subr.bf16.mxu0 0
          %812 = vmatpush1.bf16.msra.mxu0 0
          %813 = vmatprep.subr.bf16.mxu0 0
          %814 = vmatpush1.bf16.msra.mxu0 0
          %815 = vmatprep.subr.bf16.mxu0 0
          %816 = vmatpush1.bf16.msra.mxu0 0
          %817 = vmatprep.subr.bf16.mxu0 0
          %818 = vmatpush1.bf16.msra.mxu0 0
          %819 = vmatprep.subr.bf16.mxu0 0
          %820 = vmatpush1.bf16.msra.mxu0 0
          %821 = vmatprep.subr.bf16.mxu0 0
          %822 = vmatpush1.bf16.msra.mxu0 0
          %823 = vmatprep.subr.bf16.mxu0 0
          %824 = vmatpush1.bf16.msra.mxu0 0
          %825 = vmatprep.subr.bf16.mxu0 0
          %826 = vmatpush1.bf16.msra.mxu0 0
          %827 = vmatprep.subr.bf16.mxu0 0
          %828 = vmatpush1.bf16.msra.mxu0 0
          %829 = vmatprep.subr.bf16.mxu0 0
          %830 = vmatpush1.bf16.msra.mxu0 0
          %831 = vmatprep.subr.bf16.mxu0 0
          %832 = vmatpush1.bf16.msra.mxu0 0
          %833 = vmatprep.mubr.bf16.mxu0 0
          %834 = vmatmul.mubr.bf16.gmra.mrb[0].mxu0 %v743
          %v835 = vpop.f32.mrb[0].mxu0
          %v836 = vadd.f32 %v714, %v835
          %v837 = vpop.f32.mrb[0].mxu0
          %v838 = vadd.f32 %v714, %v837
          %v839 = vpop.f32.mrb[0].mxu0
          %v840 = vadd.f32 %v719, %v839
          %v841 = vpop.f32.mrb[0].mxu0
          %v842 = vadd.f32 %v719, %v841
          %843 = vmatprep.mubr.bf16.mxu0 0
          %844 = vmatmul.mubr.bf16.gmra.mrb[0].mxu0 %v746
          %v845 = vpop.f32.mrb[0].mxu0
          %v846 = vadd.f32 %v724, %v845
          %v847 = vpop.f32.mrb[0].mxu0
          %v848 = vadd.f32 %v724, %v847
          %v849 = vpop.f32.mrb[0].mxu0
          %v850 = vadd.f32 %v729, %v849
          %v851 = vpop.f32.mrb[0].mxu0
          %v852 = vadd.f32 %v729, %v851
          %853 = vdwg.mxu0
          %v854 = vmax.f32 %v783, 0.0
          %v855 = vmax.f32 %v785, 0.0
          %v856 = vmax.f32 %v836, 0.0
          %v857 = vmax.f32 %v838, 0.0
          %v858 = vmax.f32 %v787, 0.0
          %v859 = vmax.f32 %v789, 0.0
          %v860 = vmax.f32 %v840, 0.0
          %v861 = vmax.f32 %v842, 0.0
          %v862 = vmax.f32 %v793, 0.0
          %v863 = vmax.f32 %v795, 0.0
          %v864 = vmax.f32 %v846, 0.0
          %v865 = vmax.f32 %v848, 0.0
          %v866 = vmax.f32 %v797, 0.0
          %v867 = vmax.f32 %v799, 0.0
          %v868 = vmax.f32 %v850, 0.0
          %v869 = vmax.f32 %v852, 0.0
          %v870 = vld [vmem:[#allocation5] sm:$0xf]
          %v871 = vld [vmem:[#allocation5 + $0x4] sm:$0xf]
          %v872 = vld [vmem:[#allocation5 + $0x8] sm:$0xf]
          %v873 = vld [vmem:[#allocation5 + $0xc] sm:$0xf]
          %v874 = vpack.c.bf16 %v858, %v854
          %v875 = vpack.c.bf16 %v859, %v855
          %v876 = vpack.c.bf16 %v860, %v856
          %v877 = vpack.c.bf16 %v861, %v857
          %v878 = vpack.c.bf16 %v866, %v862
          %v879 = vpack.c.bf16 %v867, %v863
          %v880 = vpack.c.bf16 %v868, %v864
          %v881 = vpack.c.bf16 %v869, %v865
          %v882 = vld [vmem:[%s6] sm:$0xff]
          %v883 = vld [vmem:[%s6 + $0x8] sm:$0xff]
          %v884 = vld [vmem:[%s6 + $0x10] sm:$0xff]
          %v885 = vld [vmem:[%s6 + $0x18] sm:$0xff]
          %887 = vset.pattern.permute.xlu0 0
          %888 = vperm.xlu0 %887, %v882
          %v889 = vpop.permute.xlu0 %888
          %892 = vset.pattern.permute.xlu0 0
          %893 = vperm.xlu0 %892, %v883
          %v894 = vpop.permute.xlu0 %893
          %897 = vset.pattern.permute.xlu0 0
          %898 = vperm.xlu0 %897, %v884
          %v899 = vpop.permute.xlu0 %898
          %902 = vset.pattern.permute.xlu0 0
          %903 = vperm.xlu0 %902, %v885
          %v904 = vpop.permute.xlu0 %903
          %v910 = vunpack.c.l.b16 %v870
          %v911 = vunpack.c.l.b16 %v871
          %v912 = vunpack.c.l.b16 %v872
          %v913 = vunpack.c.l.b16 %v873
          %v914 = vpack.c.b16 %v911, %v910
          %v915 = vpack.c.b16 %v913, %v912
          %v917 = vsel %vm741, %v914, 0
          %v920 = vsel %vm741, %v915, 0
          %922 = vmatprep.subr.bf16.mxu0 %v875
          %923 = vmatpush1.bf16.msra.mxu0 %v874
          %924 = vmatprep.subr.bf16.mxu0 %v879
          %925 = vmatpush1.bf16.msra.mxu0 %v878
          %926 = vmatprep.subr.bf16.mxu0 0
          %927 = vmatpush1.bf16.msra.mxu0 0
          %928 = vmatprep.subr.bf16.mxu0 0
          %929 = vmatpush1.bf16.msra.mxu0 0
          %930 = vmatprep.subr.bf16.mxu0 0
          %931 = vmatpush1.bf16.msra.mxu0 0
          %932 = vmatprep.subr.bf16.mxu0 0
          %933 = vmatpush1.bf16.msra.mxu0 0
          %934 = vmatprep.subr.bf16.mxu0 0
          %935 = vmatpush1.bf16.msra.mxu0 0
          %936 = vmatprep.subr.bf16.mxu0 0
          %937 = vmatpush1.bf16.msra.mxu0 0
          %938 = vmatprep.subr.bf16.mxu0 0
          %939 = vmatpush1.bf16.msra.mxu0 0
          %940 = vmatprep.subr.bf16.mxu0 0
          %941 = vmatpush1.bf16.msra.mxu0 0
          %942 = vmatprep.subr.bf16.mxu0 0
          %943 = vmatpush1.bf16.msra.mxu0 0
          %944 = vmatprep.subr.bf16.mxu0 0
          %945 = vmatpush1.bf16.msra.mxu0 0
          %946 = vmatprep.subr.bf16.mxu0 0
          %947 = vmatpush1.bf16.msra.mxu0 0
          %948 = vmatprep.subr.bf16.mxu0 0
          %949 = vmatpush1.bf16.msra.mxu0 0
          %950 = vmatprep.subr.bf16.mxu0 0
          %951 = vmatpush1.bf16.msra.mxu0 0
          %952 = vmatprep.subr.bf16.mxu0 0
          %953 = vmatpush1.bf16.msra.mxu0 0
          %954 = vmatprep.mubr.bf16.mxu0 0
          %955 = vmatmul.mubr.bf16.gmra.mrb[0].mxu0 %v917
          %v956 = vpop.f32.mrb[0].mxu0
          %v957 = vadd.f32 %v889, %v956
          %v958 = vpop.f32.mrb[0].mxu0
          %v959 = vadd.f32 %v889, %v958
          %v960 = vpop.f32.mrb[0].mxu0
          %v961 = vadd.f32 %v894, %v960
          %v962 = vpop.f32.mrb[0].mxu0
          %v963 = vadd.f32 %v894, %v962
          %964 = vmatprep.mubr.bf16.mxu0 0
          %965 = vmatmul.mubr.bf16.gmra.mrb[0].mxu0 %v920
          %v966 = vpop.f32.mrb[0].mxu0
          %v967 = vadd.f32 %v899, %v966
          %v968 = vpop.f32.mrb[0].mxu0
          %v969 = vadd.f32 %v899, %v968
          %v970 = vpop.f32.mrb[0].mxu0
          %v971 = vadd.f32 %v904, %v970
          %v972 = vpop.f32.mrb[0].mxu0
          %v973 = vadd.f32 %v904, %v972
          %974 = vdwg.mxu0
          %975 = vmatprep.subr.bf16.mxu0 %v877
          %976 = vmatpush1.bf16.msra.mxu0 %v876
          %977 = vmatprep.subr.bf16.mxu0 %v881
          %978 = vmatpush1.bf16.msra.mxu0 %v880
          %979 = vmatprep.subr.bf16.mxu0 0
          %980 = vmatpush1.bf16.msra.mxu0 0
          %981 = vmatprep.subr.bf16.mxu0 0
          %982 = vmatpush1.bf16.msra.mxu0 0
          %983 = vmatprep.subr.bf16.mxu0 0
          %984 = vmatpush1.bf16.msra.mxu0 0
          %985 = vmatprep.subr.bf16.mxu0 0
          %986 = vmatpush1.bf16.msra.mxu0 0
          %987 = vmatprep.subr.bf16.mxu0 0
          %988 = vmatpush1.bf16.msra.mxu0 0
          %989 = vmatprep.subr.bf16.mxu0 0
          %990 = vmatpush1.bf16.msra.mxu0 0
          %991 = vmatprep.subr.bf16.mxu0 0
          %992 = vmatpush1.bf16.msra.mxu0 0
          %993 = vmatprep.subr.bf16.mxu0 0
          %994 = vmatpush1.bf16.msra.mxu0 0
          %995 = vmatprep.subr.bf16.mxu0 0
          %996 = vmatpush1.bf16.msra.mxu0 0
          %997 = vmatprep.subr.bf16.mxu0 0
          %998 = vmatpush1.bf16.msra.mxu0 0
          %999 = vmatprep.subr.bf16.mxu0 0
          %1000 = vmatpush1.bf16.msra.mxu0 0
          %1001 = vmatprep.subr.bf16.mxu0 0
          %1002 = vmatpush1.bf16.msra.mxu0 0
          %1003 = vmatprep.subr.bf16.mxu0 0
          %1004 = vmatpush1.bf16.msra.mxu0 0
          %1005 = vmatprep.subr.bf16.mxu0 0
          %1006 = vmatpush1.bf16.msra.mxu0 0
          %1007 = vmatprep.mubr.bf16.mxu0 0
          %1008 = vmatmul.mubr.bf16.gmra.mrb[0].mxu0 %v917
          %v1009 = vpop.f32.mrb[0].mxu0
          %v1010 = vadd.f32 %v889, %v1009
          %v1011 = vpop.f32.mrb[0].mxu0
          %v1012 = vadd.f32 %v889, %v1011
          %v1013 = vpop.f32.mrb[0].mxu0
          %v1014 = vadd.f32 %v894, %v1013
          %v1015 = vpop.f32.mrb[0].mxu0
          %v1016 = vadd.f32 %v894, %v1015
          %1017 = vmatprep.mubr.bf16.mxu0 0
          %1018 = vmatmul.mubr.bf16.gmra.mrb[0].mxu0 %v920
          %v1019 = vpop.f32.mrb[0].mxu0
          %v1020 = vadd.f32 %v899, %v1019
          %v1021 = vpop.f32.mrb[0].mxu0
          %v1022 = vadd.f32 %v899, %v1021
          %v1023 = vpop.f32.mrb[0].mxu0
          %v1024 = vadd.f32 %v904, %v1023
          %v1025 = vpop.f32.mrb[0].mxu0
          %v1026 = vadd.f32 %v904, %v1025
          %1027 = vdwg.mxu0
          %1028 = vst [vmem:[%s487] sm:$0xff] %v957
          %1029 = vst [vmem:[%s487 + $0x8] sm:$0xff] %v959
          %1030 = vst [vmem:[%s487 + $0x10] sm:$0xff] %v1010
          %1031 = vst [vmem:[%s487 + $0x18] sm:$0xff] %v1012
          %1032 = vst [vmem:[%s487 + $0x20] sm:$0xff] %v961
          %1033 = vst [vmem:[%s487 + $0x28] sm:$0xff] %v963
          %1034 = vst [vmem:[%s487 + $0x30] sm:$0xff] %v1014
          %1035 = vst [vmem:[%s487 + $0x38] sm:$0xff] %v1016
          %1036 = vst [vmem:[%s487 + $0x40] sm:$0xff] %v967
          %1037 = vst [vmem:[%s487 + $0x48] sm:$0xff] %v969
          %1038 = vst [vmem:[%s487 + $0x50] sm:$0xff] %v1020
          %1039 = vst [vmem:[%s487 + $0x58] sm:$0xff] %v1022
          %1040 = vst [vmem:[%s487 + $0x60] sm:$0xff] %v971
          %1041 = vst [vmem:[%s487 + $0x68] sm:$0xff] %v973
          %1042 = vst [vmem:[%s487 + $0x70] sm:$0xff] %v1024
          %1043 = vst [vmem:[%s487 + $0x78] sm:$0xff] %v1026
        $region91: #{tpu_custom_call.1} parent=74 // pred_fallthru
          _
        %v1044 = vld [vmem:[%s493] sm:$0xf]
        %v1045 = vld [vmem:[%s493 + $0x4] sm:$0xf]
        %v1046 = vld [vmem:[%s438] sm:$0xff]
        %v1047 = vld [vmem:[%s438 + $0x8] sm:$0xff]
        %v1048 = vld [vmem:[%s438 + $0x10] sm:$0xff]
        %v1049 = vld [vmem:[%s438 + $0x18] sm:$0xff]
        %v1050 = vld [vmem:[%s438 + $0x20] sm:$0xff]
        %v1051 = vld [vmem:[%s438 + $0x28] sm:$0xff]
        %v1052 = vld [vmem:[%s438 + $0x30] sm:$0xff]
        %v1053 = vld [vmem:[%s438 + $0x38] sm:$0xff]
        %v1056 = vunpack.c.l.b16 %v1044
        %v1057 = vunpack.c.l.b16 %v1045
        %v1058 = vpack.c.b16 %v1057, %v1056
        %v1067 = vunpack.c.l.b16 %v1046
        %v1068 = vunpack.c.h.b16 %v1046
        %v1069 = vunpack.c.l.b16 %v1047
        %v1070 = vunpack.c.h.b16 %v1047
        %v1071 = vunpack.c.l.b16 %v1048
        %v1072 = vunpack.c.h.b16 %v1048
        %v1073 = vunpack.c.l.b16 %v1049
        %v1074 = vunpack.c.h.b16 %v1049
        %v1075 = vunpack.c.l.b16 %v1050
        %v1076 = vunpack.c.h.b16 %v1050
        %v1077 = vunpack.c.l.b16 %v1051
        %v1078 = vunpack.c.h.b16 %v1051
        %v1079 = vunpack.c.l.b16 %v1052
        %v1080 = vunpack.c.h.b16 %v1052
        %v1081 = vunpack.c.l.b16 %v1053
        %v1082 = vunpack.c.h.b16 %v1053
        %v1083 = vpack.c.b16 %v1071, %v1067
        %v1084 = vpack.c.b16 %v1072, %v1068
        %v1085 = vpack.c.b16 %v1073, %v1069
        %v1086 = vpack.c.b16 %v1074, %v1070
        %v1087 = vpack.c.b16 %v1079, %v1075
        %v1088 = vpack.c.b16 %v1080, %v1076
        %v1089 = vpack.c.b16 %v1081, %v1077
        %v1090 = vpack.c.b16 %v1082, %v1078
        %vm1099 = vcmask 261120
        %v1101 = vsel %vm1099, %v1058, 0
        %1103 = vmatprep.subr.bf16.mxu0 %v1084
        %1104 = vmatpush1.bf16.msra.mxu0 %v1083
        %1105 = vmatprep.subr.bf16.mxu0 %v1088
        %1106 = vmatpush1.bf16.msra.mxu0 %v1087
        %1107 = vmatprep.subr.bf16.mxu0 0
        %1108 = vmatpush1.bf16.msra.mxu0 0
        %1109 = vmatprep.subr.bf16.mxu0 0
        %1110 = vmatpush1.bf16.msra.mxu0 0
        %1111 = vmatprep.subr.bf16.mxu0 0
        %1112 = vmatpush1.bf16.msra.mxu0 0
        %1113 = vmatprep.subr.bf16.mxu0 0
        %1114 = vmatpush1.bf16.msra.mxu0 0
        %1115 = vmatprep.subr.bf16.mxu0 0
        %1116 = vmatpush1.bf16.msra.mxu0 0
        %1117 = vmatprep.subr.bf16.mxu0 0
        %1118 = vmatpush1.bf16.msra.mxu0 0
        %1119 = vmatprep.subr.bf16.mxu0 0
        %1120 = vmatpush1.bf16.msra.mxu0 0
        %1121 = vmatprep.subr.bf16.mxu0 0
        %1122 = vmatpush1.bf16.msra.mxu0 0
        %1123 = vmatprep.subr.bf16.mxu0 0
        %1124 = vmatpush1.bf16.msra.mxu0 0
        %1125 = vmatprep.subr.bf16.mxu0 0
        %1126 = vmatpush1.bf16.msra.mxu0 0
        %1127 = vmatprep.subr.bf16.mxu0 0
        %1128 = vmatpush1.bf16.msra.mxu0 0
        %1129 = vmatprep.subr.bf16.mxu0 0
        %1130 = vmatpush1.bf16.msra.mxu0 0
        %1131 = vmatprep.subr.bf16.mxu0 0
        %1132 = vmatpush1.bf16.msra.mxu0 0
        %1133 = vmatprep.subr.bf16.mxu0 0
        %1134 = vmatpush1.bf16.msra.mxu0 0
        %1135 = vmatprep.mubr.bf16.mxu0 0
        %1136 = vmatmul.mubr.bf16.gmra.mrb[0].mxu0 %v1101
        %v1137 = vpop.f32.mrb[0].mxu0
        %v1138 = vadd.f32 0.0, %v1137
        %v1139 = vpop.f32.mrb[0].mxu0
        %v1140 = vadd.f32 0.0, %v1139
        %v1141 = vpop.f32.mrb[0].mxu0
        %v1142 = vadd.f32 0.0, %v1141
        %v1143 = vpop.f32.mrb[0].mxu0
        %v1144 = vadd.f32 0.0, %v1143
        %1145 = vdwg.mxu0
        %1146 = vmatprep.subr.bf16.mxu0 %v1086
        %1147 = vmatpush1.bf16.msra.mxu0 %v1085
        %1148 = vmatprep.subr.bf16.mxu0 %v1090
        %1149 = vmatpush1.bf16.msra.mxu0 %v1089
        %1150 = vmatprep.subr.bf16.mxu0 0
        %1151 = vmatpush1.bf16.msra.mxu0 0
        %1152 = vmatprep.subr.bf16.mxu0 0
        %1153 = vmatpush1.bf16.msra.mxu0 0
        %1154 = vmatprep.subr.bf16.mxu0 0
        %1155 = vmatpush1.bf16.msra.mxu0 0
        %1156 = vmatprep.subr.bf16.mxu0 0
        %1157 = vmatpush1.bf16.msra.mxu0 0
        %1158 = vmatprep.subr.bf16.mxu0 0
        %1159 = vmatpush1.bf16.msra.mxu0 0
        %1160 = vmatprep.subr.bf16.mxu0 0
        %1161 = vmatpush1.bf16.msra.mxu0 0
        %1162 = vmatprep.subr.bf16.mxu0 0
        %1163 = vmatpush1.bf16.msra.mxu0 0
        %1164 = vmatprep.subr.bf16.mxu0 0
        %1165 = vmatpush1.bf16.msra.mxu0 0
        %1166 = vmatprep.subr.bf16.mxu0 0
        %1167 = vmatpush1.bf16.msra.mxu0 0
        %1168 = vmatprep.subr.bf16.mxu0 0
        %1169 = vmatpush1.bf16.msra.mxu0 0
        %1170 = vmatprep.subr.bf16.mxu0 0
        %1171 = vmatpush1.bf16.msra.mxu0 0
        %1172 = vmatprep.subr.bf16.mxu0 0
        %1173 = vmatpush1.bf16.msra.mxu0 0
        %1174 = vmatprep.subr.bf16.mxu0 0
        %1175 = vmatpush1.bf16.msra.mxu0 0
        %1176 = vmatprep.subr.bf16.mxu0 0
        %1177 = vmatpush1.bf16.msra.mxu0 0
        %1178 = vmatprep.mubr.bf16.mxu0 0
        %1179 = vmatmul.mubr.bf16.gmra.mrb[0].mxu0 %v1101
        %v1180 = vpop.f32.mrb[0].mxu0
        %v1181 = vadd.f32 0.0, %v1180
        %v1182 = vpop.f32.mrb[0].mxu0
        %v1183 = vadd.f32 0.0, %v1182
        %v1184 = vpop.f32.mrb[0].mxu0
        %v1185 = vadd.f32 0.0, %v1184
        %v1186 = vpop.f32.mrb[0].mxu0
        %v1187 = vadd.f32 0.0, %v1186
        %1188 = vdwg.mxu0
        %1189 = vst [vmem:[%s480] sm:$0xff] %v1138
        %1190 = vst [vmem:[%s480 + $0x8] sm:$0xff] %v1140
        %1191 = vst [vmem:[%s480 + $0x10] sm:$0xff] %v1181
        %1192 = vst [vmem:[%s480 + $0x18] sm:$0xff] %v1183
        %1193 = vst [vmem:[%s480 + $0x20] sm:$0xff] %v1142
        %1194 = vst [vmem:[%s480 + $0x28] sm:$0xff] %v1144
        %1195 = vst [vmem:[%s480 + $0x30] sm:$0xff] %v1185
        %1196 = vst [vmem:[%s480 + $0x38] sm:$0xff] %v1187
        %s1197 = sand.u32 %s258, 1
        %s1198 = scalar_lea.sflag [#allocation4], %s1197
        %s1199 = sand.u32 %s258, 1
        %s1200 = smul.addr %s1199, 64
        %s1201 = scalar_lea.vmem [#allocation8], %s1200
        %s1202 = sand.u32 %s284, 1
        %s1203 = scalar_lea.sflag [#allocation10], %s1202
        %s1204 = sand.u32 %s284, 1
        %s1205 = smul.addr %s1204, 128
        %s1206 = scalar_lea.vmem [#allocation9], %s1205
        // Predicated region
        $region92: #{tpu_custom_call.1} parent=74 // pred_check
          %p1207 = pneg %p268
        $region93: #{tpu_custom_call.1} parent=74 // pred_check_branch
          %1209 = sbr.rel (%p1207) target = $region95
        $region94: #{tpu_custom_call.1} parent=74 // pred_region
          %s1210 = smul.u32 2, %s37
          %s1211 = smul.u32 4, %s36
          %s1213 = ssub.s32 1024, 1024
          %1214 = vsyncadd %s1198, %s1213
          %s1215 = smul.addr %s1210, 8
          %s1216 = sadd.s32 %s1211, %s1215
          %s1217 = smul.addr %s1216, 128
          %s1218 = scalar_lea.hbm %s9, %s1217
          %s1219 = sshll.u32 %s1201, 4
          %s1220 = int_to_ptr.vmem [resolvable:$true] %s1219
          %1225 = dma.vmem_to_hbm [thread:$0]  %s1220, 1024, %s1218, %s1198, 512, 1024, 32
        $region95: #{tpu_custom_call.1} parent=74 // pred_fallthru
          _
        // Predicated region
        $region96: #{tpu_custom_call.1} parent=74 // pred_check
          %p1226 = pneg %p294
        $region97: #{tpu_custom_call.1} parent=74 // pred_check_branch
          %1228 = sbr.rel (%p1226) target = $region99
        $region98: #{tpu_custom_call.1} parent=74 // pred_region
          %s1229 = smul.u32 4, %s36
          %s1231 = ssub.s32 2048, 2048
          %1232 = vsyncadd %s1203, %s1231
          %s1233 = smul.addr %s1229, 128
          %s1234 = scalar_lea.hbm %s10, %s1233
          %s1235 = sshll.u32 %s1206, 4
          %s1236 = int_to_ptr.vmem [resolvable:$true] %s1235
          %1241 = dma.vmem_to_hbm [thread:$0]  %s1236, 2048, %s1234, %s1203, 512, 1024, 32
        $region99: #{tpu_custom_call.1} parent=74 // pred_fallthru
          _
      $region75: #{tpu_custom_call.1} parent=5 // pred_fallthru
        _
      %p1242 = scmp.le.s32.totalorder 2, %s27
      // Predicated region
      $region100: #{tpu_custom_call.1} parent=5 // pred_check
        %p1243 = pneg %p1242
      $region101: #{tpu_custom_call.1} parent=5 // pred_check_branch
        %1245 = sbr.rel (%p1243) target = $region103
      $region102: #{tpu_custom_call.1} parent=5 // pred_region
        %s1246 = ssub.s32 %s27, 2
        // Predicated region
        $region104: #{tpu_custom_call.1} parent=102 // pred_check
          %p1247 = pneg %p274
        $region105: #{tpu_custom_call.1} parent=102 // pred_check_branch
          %1249 = sbr.rel (%p1247) target = $region107
        $region106: #{tpu_custom_call.1} parent=102 // pred_region
          %s1250 = sand.u32 %s259, 1
          %s1251 = scalar_lea.sflag [#allocation4], %s1250
          %s1252 = sand.u32 %s259, 1
          %s1253 = smul.addr %s1252, 64
          %s1254 = scalar_lea.vmem [#allocation8], %s1253
          %1255 = dma.done %s1251, 1024
        $region107: #{tpu_custom_call.1} parent=102 // pred_fallthru
          _
        // Predicated region
        $region108: #{tpu_custom_call.1} parent=102 // pred_check
          %p1256 = pneg %p300
        $region109: #{tpu_custom_call.1} parent=102 // pred_check_branch
          %1258 = sbr.rel (%p1256) target = $region111
        $region110: #{tpu_custom_call.1} parent=102 // pred_region
          %s1259 = sand.u32 %s285, 1
          %s1260 = scalar_lea.sflag [#allocation10], %s1259
          %s1261 = sand.u32 %s285, 1
          %s1262 = smul.addr %s1261, 128
          %s1263 = scalar_lea.vmem [#allocation9], %s1262
          %1264 = dma.done %s1260, 2048
        $region111: #{tpu_custom_call.1} parent=102 // pred_fallthru
          _
      $region103: #{tpu_custom_call.1} parent=5 // pred_fallthru
        _
    $region6: #{tpu_custom_call.1} parent=1 // loop_footer
      %s31 = sadd.s32 1, %s27
    $region7: #{tpu_custom_call.1} parent=1 // loop_footer_branch
      %26 = sbr.rel target = $region3
    $region8: #{tpu_custom_call.1} parent=1 // loop_exit
      _
    %1265 = vsyncpa [#allocation3], 1
    %s1266 = scalar_lea.sflag [#allocation3], 1
    %1267 = vsyncpa %s1266, 1
    %1268 = vsyncpa [#allocation6], 1
    %1269 = vsyncpa [#allocation4], 1
    %s1270 = scalar_lea.sflag [#allocation4], 1
    %1271 = vsyncpa %s1270, 1
    %1272 = vsyncpa [#allocation10], 1
    %s1273 = scalar_lea.sflag [#allocation10], 1
    %1274 = vsyncpa %s1273, 1

</llo_original>
